<compile_context>
chip_gen: v6e
topology: v6e:2x2x1
jax: 0.10.0
libtpu: 0.0.40
codegen_flags: <defaults>
</compile_context>

<pallas_src>
import functools
import math

import jax
import jax.numpy as jnp
from jax.experimental import pallas as pl
from jax.experimental.pallas import tpu as pltpu


# ---------------------------------------------------------------------------
# Kernels
# ---------------------------------------------------------------------------

def _conv_gate(w_ref, avg, *, taps, pad, channels):
    """k-tap zero-padded conv over the channel (sublane) axis + sigmoid.

    w_ref: (k, C, 1) VMEM ref with tap j broadcast along channels.
    avg:   (TB, C, 1) f32 pooled values.
    Returns the (TB, C, 1) f32 sigmoid gate.
    """
    if pad:
        zeros = jnp.zeros((avg.shape[0], pad, 1), jnp.float32)
        padded = jnp.concatenate([zeros, avg, zeros], axis=1)   # (TB, C+2p, 1)
    else:
        padded = avg
    conv = jnp.zeros(avg.shape, jnp.float32)
    for j in range(taps):                        # static, k in {1,3,5,7}
        conv = conv + w_ref[j] * padded[:, j:j + channels, :]
    return jax.nn.sigmoid(conv)


def _fca_fused_kernel(w_ref, x_ref, o_ref, *, inv_hw, taps, pad, channels):
    """Single pass: pool + conv + sigmoid + scale for one (TB, C, HW) slab."""
    x = x_ref[...]                                               # native dtype
    avg = jnp.sum(x, axis=-1, keepdims=True, dtype=jnp.float32) * inv_hw
    y = _conv_gate(w_ref, avg, taps=taps, pad=pad, channels=channels)
    o_ref[...] = x * y.astype(o_ref.dtype)


def _fca_reduce_gate_kernel(w_ref, x_ref, y_ref, acc_ref, *,
                            inv_hw, taps, pad, channels):
    """Pass 1 (tiled): accumulate spatial sums, emit the (TB, C, 1) gate."""
    s = pl.program_id(1)

    @pl.when(s == 0)
    def _init():
        acc_ref[...] = jnp.zeros_like(acc_ref)

    acc_ref[...] += jnp.sum(x_ref[...], axis=-1, keepdims=True,
                            dtype=jnp.float32)

    @pl.when(s == pl.num_programs(1) - 1)
    def _finalize():
        avg = acc_ref[...] * inv_hw
        y_ref[...] = _conv_gate(w_ref, avg, taps=taps, pad=pad,
                                channels=channels)


def _fca_scale_kernel(y_ref, x_ref, o_ref):
    """Pass 2 (tiled): broadcast-multiply x by the per-channel gate."""
    o_ref[...] = x_ref[...] * y_ref[...].astype(o_ref.dtype)


# ---------------------------------------------------------------------------
# Wrapper / tiling heuristics
# ---------------------------------------------------------------------------

_FUSED_BLOCK_BUDGET = 4 << 20   # bytes for one (TB, C, HW) x-block (fused path)
_TILED_BLOCK_BUDGET = 2 << 20   # bytes for one (TB, C, TS) x-block (tiled path)


def _largest_divisor_leq(n, cap):
    cap = max(1, min(n, cap))
    for d in range(cap, 0, -1):
        if n % d == 0:
            return d
    return 1


def _pick_lane_tile(hw_p, channels, itemsize, lane_tile=None):
    if lane_tile is not None:
        if lane_tile % 128 or hw_p % lane_tile:
            raise ValueError("lane_tile must be a multiple of 128 that divides "
                             "the padded H*W")
        return lane_tile
    # Target ~1 MiB per (1, C, TS) row-slab; clamp to [128, hw_p], multiple of
    # 128 dividing hw_p (hw_p is always a multiple of 128 after padding).
    target = max(128, (1 << 20) // max(1, channels * itemsize))
    ts = min(hw_p, (target // 128) * 128)
    while hw_p % ts:
        ts -= 128
    return ts


def fca_forward(x, conv_w, *, force_two_pass=False, lane_tile=None):
    """fca / ECA channel attention.  x: (B, C, H, W), conv_w: (k,) weights."""
    B, C, H, W = x.shape
    k = int(conv_w.shape[0])
    pad = (k - 1) // 2
    HW = H * W
    itemsize = jnp.dtype(x.dtype).itemsize

    x3 = x.reshape(B, C, HW)
    # Lane-dense guard: pad the flattened spatial dim up to a multiple of 128.
    HW_p = ((HW + 127) // 128) * 128
    if HW_p != HW:
        x3 = jnp.pad(x3, ((0, 0), (0, 0), (0, HW_p - HW)))

    # k taps broadcast along channels -> pure VPU multiplies inside the kernel.
    w_b = jnp.broadcast_to(conv_w.astype(jnp.float32).reshape(k, 1, 1),
                           (k, C, 1))
    inv_hw = 1.0 / float(HW)        # padded tail is zero, divide by true H*W

    slab = C * HW_p * itemsize
    use_fused = (not force_two_pass) and slab <= _FUSED_BLOCK_BUDGET

    if use_fused:
        # Whole (TB, C, HW) slab per grid step (one step for small inputs).
        TB = _largest_divisor_leq(B, _FUSED_BLOCK_BUDGET // slab)
        out = pl.pallas_call(
            functools.partial(_fca_fused_kernel, inv_hw=inv_hw, taps=k,
                              pad=pad, channels=C),
            out_shape=jax.ShapeDtypeStruct((B, C, HW_p), x.dtype),
            grid=(B // TB,),
            in_specs=[
                pl.BlockSpec((k, C, 1), lambda b: (0, 0, 0)),
                pl.BlockSpec((TB, C, HW_p), lambda b: (b, 0, 0)),
            ],
            out_specs=pl.BlockSpec((TB, C, HW_p), lambda b: (b, 0, 0)),
            compiler_params=pltpu.CompilerParams(
                dimension_semantics=("parallel",)),
        )(w_b, x3)
    else:
        # Spatially tiled two-pass scheme: VMEM use independent of H*W.
        TS = _pick_lane_tile(HW_p, C, itemsize, lane_tile)
        TB = _largest_divisor_leq(
            B, _TILED_BLOCK_BUDGET // max(1, C * TS * itemsize))
        nb, ns = B // TB, HW_p // TS

        # Pass 1: tiled sum-reduce -> per-channel sigmoid gate (B, C, 1).
        gate = pl.pallas_call(
            functools.partial(_fca_reduce_gate_kernel, inv_hw=inv_hw, taps=k,
                              pad=pad, channels=C),
            out_shape=jax.ShapeDtypeStruct((B, C, 1), jnp.float32),
            grid=(nb, ns),
            in_specs=[
                pl.BlockSpec((k, C, 1), lambda b, s: (0, 0, 0)),
                pl.BlockSpec((TB, C, TS), lambda b, s: (b, 0, s)),
            ],
            out_specs=pl.BlockSpec((TB, C, 1), lambda b, s: (b, 0, 0)),
            scratch_shapes=[pltpu.VMEM((TB, C, 1), jnp.float32)],
            compiler_params=pltpu.CompilerParams(
                dimension_semantics=("parallel", "arbitrary")),
        )(w_b, x3)

        # Pass 2: tiled broadcast multiply (both grid axes parallel).
        out = pl.pallas_call(
            _fca_scale_kernel,
            out_shape=jax.ShapeDtypeStruct((B, C, HW_p), x.dtype),
            grid=(nb, ns),
            in_specs=[
                pl.BlockSpec((TB, C, 1), lambda b, s: (b, 0, 0)),
                pl.BlockSpec((TB, C, TS), lambda b, s: (b, 0, s)),
            ],
            out_specs=pl.BlockSpec((TB, C, TS), lambda b, s: (b, 0, s)),
            compiler_params=pltpu.CompilerParams(
                dimension_semantics=("parallel", "parallel")),
        )(gate, x3)

    if HW_p != HW:
        out = out[:, :, :HW]
    return out.reshape(B, C, H, W)


# ---------------------------------------------------------------------------
# Pure-JAX reference (mirrors the PyTorch forward exactly)
# ---------------------------------------------------------------------------

def fca_reference(x, conv_w):
    B, C, H, W = x.shape
    k = conv_w.shape[0]
    pad = (k - 1) // 2
    xf = x.astype(jnp.float32)
    avg = jnp.mean(xf, axis=(2, 3))                          # (B, C)
    avg_p = jnp.pad(avg, ((0, 0), (pad, pad)))               # zero-pad channels
    conv = jnp.zeros((B, C), jnp.float32)
    for j in range(k):
        conv = conv + conv_w[j] * avg_p[:, j:j + C]
    y = jax.nn.sigmoid(conv)                                 # (B, C)
    return (xf * y[:, :, None, None]).astype(x.dtype)


if __name__ == "__main__":
    # Shapes consistent with the module: batch=2, channels=16, spatial=16x16.
    B, C, H, W = 2, 16, 16, 16
    gamma, b = 2, 1
    t = int(abs((math.log(C, 2) + b) / gamma))
    k_size = t if t % 2 else t + 1                           # C=16 -> k=3

    key = jax.random.PRNGKey(0)
    kx, kw = jax.random.split(key)
    x = jax.random.normal(kx, (B, C, H, W), dtype=jnp.float32)
    bound = 1.0 / math.sqrt(k_size)                          # Conv1d default init
    conv_w = jax.random.uniform(kw, (k_size,), dtype=jnp.float32,
                                minval=-bound, maxval=bound)

    ref = fca_reference(x, conv_w)

    # Fused single-pass path (auto-selected for this size: grid = (1,)).
    out = jax.block_until_ready(fca_forward(x, conv_w))
    assert out.shape == ref.shape == (B, C, H, W)
    assert jnp.allclose(out, ref, atol=1e-5, rtol=1e-5), \
        float(jnp.max(jnp.abs(out - ref)))

    # Spatially tiled two-pass path (the large-H*W / v7x-safe path), forced
    # with 128-lane tiles so the cross-tile sum accumulation is exercised.
    out2 = jax.block_until_ready(
        fca_forward(x, conv_w, force_two_pass=True, lane_tile=128))
    assert jnp.allclose(out2, ref, atol=1e-5, rtol=1e-5), \
        float(jnp.max(jnp.abs(out2 - ref)))

    print("KERNEL_OK")
</pallas_src>

<mosaic_0001>
module attributes {stable_mosaic.version = 11 : i64} {
  func.func @_fca_fused_kernel(%arg0: i32, %arg1: memref<3x16x1xf32, #tpu.memory_space<vmem>>, %arg2: memref<2x16x256xf32, #tpu.memory_space<vmem>>, %arg3: memref<2x16x256xf32, #tpu.memory_space<vmem>>) attributes {dimension_semantics = [#tpu.dimension_semantics<parallel>], iteration_bounds = array<i64: 1>, scalar_prefetch = 0 : i64, scratch_operands = 0 : i64, tpu.core_type = #tpu.core_type<tc>, window_params = [{pipeline_mode = #tpu.pipeline_mode<synchronous>, transform_indices = @transform_0, window_bounds = array<i64: 3, 16, 1>}, {transform_indices = @transform_1, window_bounds = array<i64: 2, 16, 256>}, {transform_indices = @transform_2, window_bounds = array<i64: 2, 16, 256>}]} {
    %c0 = arith.constant 0 : index
    %c0_0 = arith.constant 0 : index
    %c0_1 = arith.constant 0 : index
    %0 = vector.load %arg2[%c0, %c0_0, %c0_1] : memref<2x16x256xf32, #tpu.memory_space<vmem>>, vector<2x16x256xf32>
    %cst = arith.constant dense<0.000000e+00> : vector<2x16xf32>
    %1 = vector.multi_reduction <add>, %0, %cst [2] : vector<2x16x256xf32> to vector<2x16xf32>
    %2 = vector.shape_cast %1 : vector<2x16xf32> to vector<2x16x1xf32>
    %cst_2 = arith.constant 3.906250e-03 : f32
    %3 = vector.broadcast %cst_2 : f32 to vector<2x16x1xf32>
    %4 = arith.mulf %2, %3 : vector<2x16x1xf32>
    %cst_3 = arith.constant 0.000000e+00 : f32
    %5 = vector.broadcast %cst_3 : f32 to vector<2x1x1xf32>
    %6 = tpu.concatenate %5, %4, %5 in 1 : vector<2x1x1xf32>, vector<2x16x1xf32>, vector<2x1x1xf32> -> vector<2x18x1xf32>
    %cst_4 = arith.constant 0.000000e+00 : f32
    %7 = vector.broadcast %cst_4 : f32 to vector<2x16x1xf32>
    %c0_5 = arith.constant 0 : index
    %c0_6 = arith.constant 0 : index
    %c0_7 = arith.constant 0 : index
    %8 = vector.load %arg1[%c0_5, %c0_6, %c0_7] : memref<3x16x1xf32, #tpu.memory_space<vmem>>, vector<1x16x1xf32>
    %9 = vector.shape_cast %8 : vector<1x16x1xf32> to vector<16x1xf32>
    %10 = vector.extract_strided_slice %6 {offsets = [0, 0, 0], sizes = [2, 16, 1], strides = [1, 1, 1]} : vector<2x18x1xf32> to vector<2x16x1xf32>
    %11 = vector.shape_cast %9 : vector<16x1xf32> to vector<1x16x1xf32>
    %12 = vector.broadcast %11 : vector<1x16x1xf32> to vector<2x16x1xf32>
    %13 = arith.mulf %12, %10 : vector<2x16x1xf32>
    %14 = arith.addf %7, %13 : vector<2x16x1xf32>
    %c1 = arith.constant 1 : index
    %c0_8 = arith.constant 0 : index
    %c0_9 = arith.constant 0 : index
    %15 = vector.load %arg1[%c1, %c0_8, %c0_9] : memref<3x16x1xf32, #tpu.memory_space<vmem>>, vector<1x16x1xf32>
    %16 = vector.shape_cast %15 : vector<1x16x1xf32> to vector<16x1xf32>
    %17 = vector.extract_strided_slice %6 {offsets = [0, 1, 0], sizes = [2, 16, 1], strides = [1, 1, 1]} : vector<2x18x1xf32> to vector<2x16x1xf32>
    %18 = vector.shape_cast %16 : vector<16x1xf32> to vector<1x16x1xf32>
    %19 = vector.broadcast %18 : vector<1x16x1xf32> to vector<2x16x1xf32>
    %20 = arith.mulf %19, %17 : vector<2x16x1xf32>
    %21 = arith.addf %14, %20 : vector<2x16x1xf32>
    %c2 = arith.constant 2 : index
    %c0_10 = arith.constant 0 : index
    %c0_11 = arith.constant 0 : index
    %22 = vector.load %arg1[%c2, %c0_10, %c0_11] : memref<3x16x1xf32, #tpu.memory_space<vmem>>, vector<1x16x1xf32>
    %23 = vector.shape_cast %22 : vector<1x16x1xf32> to vector<16x1xf32>
    %24 = vector.extract_strided_slice %6 {offsets = [0, 2, 0], sizes = [2, 16, 1], strides = [1, 1, 1]} : vector<2x18x1xf32> to vector<2x16x1xf32>
    %25 = vector.shape_cast %23 : vector<16x1xf32> to vector<1x16x1xf32>
    %26 = vector.broadcast %25 : vector<1x16x1xf32> to vector<2x16x1xf32>
    %27 = arith.mulf %26, %24 : vector<2x16x1xf32>
    %28 = arith.addf %21, %27 : vector<2x16x1xf32>
    %29 = arith.negf %28 : vector<2x16x1xf32>
    %30 = math.exp %29 : vector<2x16x1xf32>
    %cst_12 = arith.constant 1.000000e+00 : f32
    %31 = vector.broadcast %cst_12 : f32 to vector<2x16x1xf32>
    %32 = arith.addf %31, %30 : vector<2x16x1xf32>
    %33 = arith.divf %31, %32 : vector<2x16x1xf32>
    %34 = vector.broadcast %33 : vector<2x16x1xf32> to vector<2x16x256xf32>
    %35 = arith.mulf %0, %34 : vector<2x16x256xf32>
    %c0_13 = arith.constant 0 : index
    %c0_14 = arith.constant 0 : index
    %c0_15 = arith.constant 0 : index
    %36 = vector.load %arg3[%c0_13, %c0_14, %c0_15] : memref<2x16x256xf32, #tpu.memory_space<vmem>>, vector<2x16x256xf32>
    tpu.vector_store %arg3[%c0_13, %c0_14, %c0_15], %35 {strides = array<i32>} : memref<2x16x256xf32, #tpu.memory_space<vmem>>, vector<2x16x256xf32>,
    return
  }
  func.func @transform_0(%arg0: i32) -> (i32, i32, i32) {
    %c0_i32 = arith.constant 0 : i32
    %c0_i32_0 = arith.constant 0 : i32
    %c0_i32_1 = arith.constant 0 : i32
    %c0_i32_2 = arith.constant 0 : i32
    return %c0_i32, %c0_i32_0, %c0_i32_1 : i32, i32, i32
  }
  func.func @transform_1(%arg0: i32) -> (i32, i32, i32) {
    %c0_i32 = arith.constant 0 : i32
    %c0_i32_0 = arith.constant 0 : i32
    %c0_i32_1 = arith.constant 0 : i32
    return %arg0, %c0_i32, %c0_i32_0 : i32, i32, i32
  }
  func.func @transform_2(%arg0: i32) -> (i32, i32, i32) {
    %c0_i32 = arith.constant 0 : i32
    %c0_i32_0 = arith.constant 0 : i32
    %c0_i32_1 = arith.constant 0 : i32
    return %arg0, %c0_i32, %c0_i32_0 : i32, i32, i32
  }
}

</mosaic_0001>

<llo_original>
// kernel: tpu_custom_call.1
$region0: #{tpu_custom_call.1}
  #allocation0 [shape = 'u32[]', space=smem, size = 0x4, offset = 0x4, fixed_abs, tag = 'smem constant byte address 0x4 - core index']
  #allocation1 [shape = 'u32[144,128]{1,0:T(1,128)}', space=vmem, size = 0x12000, scoped, tag = 'internal scratch']
  %s0 = inlined_call_operand.vmem [shape: f32[3,16,1], index: 0, kind: input, shape index: {}]
  %s1 = inlined_call_operand.hbm [shape: f32[2,16,256], index: 1, kind: input, shape index: {}]
  %s2 = inlined_call_operand.hbm [shape: f32[2,16,256], index: 2, kind: output, shape index: {}]
  %s3 = sld [smem:[#allocation0]]
  $region22: #{tpu_custom_call.1} parent=0
    _
  %s5 = ssub.s32 1, %s3
  %s6 = scalar_select 0, %s5, %s3
  $region1: #{tpu_custom_call.1} parent=0
    #allocation2 [shape = 'u8[32768]{0}', space=vmem, size = 0x8000, scoped, tag = 'input window, operand 1, single buffered']
    #allocation3 [shape = 's32[1]{0}', space=sflag, size = 0x4, scoped, tag = 'scoped memory for tpu_custom_call.1']
    #allocation4 [shape = 's32[1]{0}', space=sflag, size = 0x4, scoped, tag = 'scoped memory for tpu_custom_call.1']
    #allocation5 [shape = 'u8[32768]{0}', space=vmem, size = 0x8000, scoped, tag = 'output window, operand 0, single buffered']
    %7 = vsyncpa [#allocation3], 0
    %8 = vsyncpa [#allocation4], 0
    // Predicated region
    $region2: #{tpu_custom_call.1} parent=1 // pred_check
      _
    $region3: #{tpu_custom_call.1} parent=1 // pred_check_branch
      %10 = sbr.rel (0) target = $region5
    $region4: #{tpu_custom_call.1} parent=1 // pred_region
      _
    $region5: #{tpu_custom_call.1} parent=1 // pred_fallthru
      _
    // Predicated region
    $region6: #{tpu_custom_call.1} parent=1 // pred_check
      _
    $region7: #{tpu_custom_call.1} parent=1 // pred_check_branch
      %12 = sbr.rel (0) target = $region9
    $region8: #{tpu_custom_call.1} parent=1 // pred_region
      %s14 = ssub.s32 1024, 1024
      %15 = vsyncadd [#allocation3], %s14
      %s16 = sshll.u32 [#allocation2], 4
      %s17 = int_to_ptr.vmem [resolvable:$true] %s16
      %22 = dma.hbm_to_vmem [thread:$0]  %s1, 1024, %s17, [#allocation3], 256, 256, 16
    $region9: #{tpu_custom_call.1} parent=1 // pred_fallthru
      _
    // Predicated region
    $region10: #{tpu_custom_call.1} parent=1 // pred_check
      _
    $region11: #{tpu_custom_call.1} parent=1 // pred_check_branch
      %24 = sbr.rel (0) target = $region13
    $region12: #{tpu_custom_call.1} parent=1 // pred_region
      %25 = dma.done [#allocation3], 1024
    $region13: #{tpu_custom_call.1} parent=1 // pred_fallthru
      _
    %v26 = vld [vmem:[#allocation2] sm:$0xff]
    %v27 = vld [vmem:[#allocation2 + $0x8] sm:$0xff]
    %v28 = vld [vmem:[#allocation2 + $0x10] sm:$0xff]
    %v29 = vld [vmem:[#allocation2 + $0x18] sm:$0xff]
    %v30 = vld [vmem:[#allocation2 + $0x20] sm:$0xff]
    %v31 = vld [vmem:[#allocation2 + $0x28] sm:$0xff]
    %v32 = vld [vmem:[#allocation2 + $0x30] sm:$0xff]
    %v33 = vld [vmem:[#allocation2 + $0x38] sm:$0xff]
    %v34 = vadd.f32 %v26, %v27
    %35 = vadd.xlane.f32.xlu0 %v34
    %v36 = vpop.xlane.xlu0 %35
    %v37 = vadd.f32 %v28, %v29
    %38 = vadd.xlane.f32.xlu0 %v37
    %v39 = vpop.xlane.xlu0 %38
    %v40 = vadd.f32 %v30, %v31
    %41 = vadd.xlane.f32.xlu0 %v40
    %v42 = vpop.xlane.xlu0 %41
    %v43 = vadd.f32 %v32, %v33
    %44 = vadd.xlane.f32.xlu0 %v43
    %v45 = vpop.xlane.xlu0 %44
    %v46 = vmul.f32 %v36, 0.00390625
    %v47 = vmul.f32 %v39, 0.00390625
    %v48 = vmul.f32 %v42, 0.00390625
    %v49 = vmul.f32 %v45, 0.00390625
    %vm54 = vcmask 1040384
    %v55 = vrot.slane %v46, 7
    %v56 = vrot.slane %v47, 7
    %v57 = vsel %vm54, %v55, %v56
    %v58 = vrot.slane %v48, 7
    %v59 = vrot.slane %v49, 7
    %v60 = vsel %vm54, %v58, %v59
    %v67 = vsel %vm54, 0.0, %v55
    %v68 = vsel %vm54, 0.0, %v58
    %v69 = vsel %vm54, %v56, 0.0
    %v70 = vsel %vm54, %v59, 0.0
    %v71 = vld [vmem:[%s0] sm:$0xff]
    %v72 = vld [vmem:[%s0 + $0x8] sm:$0xff]
    %v73 = vmul.f32 %v71, %v67
    %v74 = vmul.f32 %v72, %v57
    %v75 = vmul.f32 %v71, %v68
    %v76 = vmul.f32 %v72, %v60
    %v77 = vadd.f32 %v73, 0.0
    %v78 = vadd.f32 %v74, 0.0
    %v79 = vadd.f32 %v75, 0.0
    %v80 = vadd.f32 %v76, 0.0
    %s81 = scalar_lea.vmem %s0, 16
    %v82 = vld [vmem:[%s81] sm:$0xff]
    %v83 = vld [vmem:[%s81 + $0x8] sm:$0xff]
    %vm88 = vcmask 1046528
    %v89 = vrot.slane %v67, 1
    %v90 = vrot.slane %v57, 1
    %v91 = vsel %vm88, %v89, %v90
    %v92 = vrot.slane %v69, 1
    %v93 = vsel %vm88, %v90, %v92
    %v94 = vrot.slane %v68, 1
    %v95 = vrot.slane %v60, 1
    %v96 = vsel %vm88, %v94, %v95
    %v97 = vrot.slane %v70, 1
    %v98 = vsel %vm88, %v95, %v97
    %v103 = vmul.f32 %v82, %v91
    %v104 = vmul.f32 %v83, %v93
    %v105 = vmul.f32 %v82, %v96
    %v106 = vmul.f32 %v83, %v98
    %v107 = vadd.f32 %v77, %v103
    %v108 = vadd.f32 %v78, %v104
    %v109 = vadd.f32 %v79, %v105
    %v110 = vadd.f32 %v80, %v106
    %s111 = scalar_lea.vmem %s0, 32
    %v112 = vld [vmem:[%s111] sm:$0xff]
    %v113 = vld [vmem:[%s111 + $0x8] sm:$0xff]
    %vm114 = vcmask 1045504
    %v115 = vrot.slane %v67, 2
    %v116 = vrot.slane %v57, 2
    %v117 = vsel %vm114, %v115, %v116
    %v118 = vrot.slane %v69, 2
    %v119 = vsel %vm114, %v116, %v118
    %v120 = vrot.slane %v68, 2
    %v121 = vrot.slane %v60, 2
    %v122 = vsel %vm114, %v120, %v121
    %v123 = vrot.slane %v70, 2
    %v124 = vsel %vm114, %v121, %v123
    %v129 = vmul.f32 %v112, %v117
    %v130 = vmul.f32 %v113, %v119
    %v131 = vmul.f32 %v112, %v122
    %v132 = vmul.f32 %v113, %v124
    %v133 = vadd.f32 %v107, %v129
    %v134 = vadd.f32 %v108, %v130
    %v135 = vadd.f32 %v109, %v131
    %v136 = vadd.f32 %v110, %v132
    %v137 = vxor.u32 %v133, 2147483648
    %v138 = vxor.u32 %v134, 2147483648
    %v139 = vxor.u32 %v135, 2147483648
    %v140 = vxor.u32 %v136, 2147483648
    %v141 = vmul.f32 %v137, 1.442695
    %v142 = vpow.pop %v141
    %v143 = vmul.f32 %v138, 1.442695
    %v144 = vpow.pop %v143
    %v145 = vmul.f32 %v139, 1.442695
    %v146 = vpow.pop %v145
    %v147 = vmul.f32 %v140, 1.442695
    %v148 = vpow.pop %v147
    %v149 = vadd.f32 %v142, 1.0
    %v150 = vadd.f32 %v144, 1.0
    %v151 = vadd.f32 %v146, 1.0
    %v152 = vadd.f32 %v148, 1.0
    %v153 = vrcp.pop %v149
    %v154 = vmul.f32 1.0, %v153
    %v155 = vrcp.pop %v150
    %v156 = vmul.f32 1.0, %v155
    %v157 = vrcp.pop %v151
    %v158 = vmul.f32 1.0, %v157
    %v159 = vrcp.pop %v152
    %v160 = vmul.f32 1.0, %v159
    %162 = vset.pattern.permute.xlu0 0
    %163 = vperm.xlu0 %162, %v154
    %v164 = vpop.permute.xlu0 %163
    %167 = vset.pattern.permute.xlu0 0
    %168 = vperm.xlu0 %167, %v156
    %v169 = vpop.permute.xlu0 %168
    %172 = vset.pattern.permute.xlu0 0
    %173 = vperm.xlu0 %172, %v158
    %v174 = vpop.permute.xlu0 %173
    %177 = vset.pattern.permute.xlu0 0
    %178 = vperm.xlu0 %177, %v160
    %v179 = vpop.permute.xlu0 %178
    %v181 = vmul.f32 %v26, %v164
    %v182 = vmul.f32 %v27, %v164
    %v183 = vmul.f32 %v28, %v169
    %v184 = vmul.f32 %v29, %v169
    %v185 = vmul.f32 %v30, %v174
    %v186 = vmul.f32 %v31, %v174
    %v187 = vmul.f32 %v32, %v179
    %v188 = vmul.f32 %v33, %v179
    %189 = vst [vmem:[#allocation5] sm:$0xff] %v181
    %190 = vst [vmem:[#allocation5 + $0x8] sm:$0xff] %v182
    %191 = vst [vmem:[#allocation5 + $0x10] sm:$0xff] %v183
    %192 = vst [vmem:[#allocation5 + $0x18] sm:$0xff] %v184
    %193 = vst [vmem:[#allocation5 + $0x20] sm:$0xff] %v185
    %194 = vst [vmem:[#allocation5 + $0x28] sm:$0xff] %v186
    %195 = vst [vmem:[#allocation5 + $0x30] sm:$0xff] %v187
    %196 = vst [vmem:[#allocation5 + $0x38] sm:$0xff] %v188
    // Predicated region
    $region14: #{tpu_custom_call.1} parent=1 // pred_check
      _
    $region15: #{tpu_custom_call.1} parent=1 // pred_check_branch
      %198 = sbr.rel (0) target = $region17
    $region16: #{tpu_custom_call.1} parent=1 // pred_region
      %s200 = ssub.s32 1024, 1024
      %201 = vsyncadd [#allocation4], %s200
      %s202 = sshll.u32 [#allocation5], 4
      %s203 = int_to_ptr.vmem [resolvable:$true] %s202
      %208 = dma.vmem_to_hbm [thread:$0]  %s203, 1024, %s2, [#allocation4], 256, 256, 16
    $region17: #{tpu_custom_call.1} parent=1 // pred_fallthru
      _
    // Predicated region
    $region18: #{tpu_custom_call.1} parent=1 // pred_check
      _
    $region19: #{tpu_custom_call.1} parent=1 // pred_check_branch
      %210 = sbr.rel (0) target = $region21
    $region20: #{tpu_custom_call.1} parent=1 // pred_region
      %211 = dma.done [#allocation4], 1024
    $region21: #{tpu_custom_call.1} parent=1 // pred_fallthru
      _
    %212 = vsyncpa [#allocation3], 1
    %213 = vsyncpa [#allocation4], 1

</llo_original>
